<compile_context>
chip_gen: v5e
topology: v5e:2x2
jax: 0.10.0
libtpu: 0.0.40
codegen_flags: <defaults>
</compile_context>

<pallas_src>
import functools

import jax
import jax.numpy as jnp
import numpy as np
from jax.experimental import pallas as pl
from jax.experimental.pallas import tpu as pltpu

_LANE = 128
_SUBLANE = 8


def _round_up(x, m):
    return (x + m - 1) // m * m


def _pick_block_batch(batch, doc_len_p, word_dim, budget_bytes=4 << 20):
    """Batch rows per grid step.

    Big enough to amortize per-grid-step overhead, small enough that the
    double-buffered bf16 emb block stays well inside scoped VMEM (v7x has only
    64 MiB total / ~32 MiB scoped by default).
    """
    per_row = doc_len_p * word_dim * 2                     # bf16 bytes / row
    bb = (budget_bytes // (2 * per_row)) // _SUBLANE * _SUBLANE
    bb = int(max(_SUBLANE, min(64, bb)))
    return min(bb, _round_up(batch, _SUBLANE))


def _towers_kernel(kernel_size, l_out, l_out_p):
    """One grid step = one tower (user/item) x one batch block."""

    def kernel(emb_ref, cw_ref, cb_ref, fw_ref, fb_ref, out_ref):
        e = emb_ref[0]                                     # (BB, doc_len_p, D) bf16
        bb = e.shape[0]

        # im2col: K shifted time-slices concatenated along the feature axis,
        # so the full-width conv becomes a single matmul (contraction = K*D).
        taps = [e[:, k:k + l_out_p, :] for k in range(kernel_size)]
        x = jnp.concatenate(taps, axis=-1)                 # (BB, l_out_p, K*D)
        x2 = x.reshape(bb * l_out_p, x.shape[-1])          # (BB*l_out_p, K*D)

        # Conv (one MXU matmul) + bias + ReLU, f32 accumulation.
        h = jnp.dot(x2, cw_ref[0], preferred_element_type=jnp.float32)
        h = jnp.maximum(h + cb_ref[0], 0.0)                # (BB*l_out_p, F_p)
        h = h.reshape(bb, l_out_p, h.shape[-1])

        # Mask padded time rows before the global max-pool over time.
        if l_out_p != l_out:
            t_idx = jax.lax.broadcasted_iota(jnp.int32, h.shape, 1)
            h = jnp.where(t_idx < l_out, h, -jnp.inf)
        feat = jnp.max(h, axis=1)                          # (BB, F_p), f32

        # FC layer (dropout == identity in eval). Lane-dense (BB, 128) store.
        out_ref[0] = (jnp.dot(feat.astype(jnp.bfloat16), fw_ref[0],
                              preferred_element_type=jnp.float32)
                      + fb_ref[0])

    return kernel


def _towers_call(emb, conv_w, conv_b, fc_w, fc_b, kernel_size,
                 l_out, l_out_p, block_batch):
    """emb: (2, B_p, doc_len_p, D) bf16; weights stacked over the tower axis."""
    _, b_p, doc_len_p, word_dim = emb.shape
    kd, f_p = conv_w.shape[1], conv_w.shape[2]
    fc_p = fc_w.shape[2]
    grid = (2, b_p // block_batch)

    return pl.pallas_call(
        _towers_kernel(kernel_size, l_out, l_out_p),
        out_shape=jax.ShapeDtypeStruct((2, b_p, fc_p), jnp.float32),
        grid=grid,
        in_specs=[
            pl.BlockSpec((1, block_batch, doc_len_p, word_dim),
                         lambda t, b: (t, b, 0, 0)),
            pl.BlockSpec((1, kd, f_p), lambda t, b: (t, 0, 0)),
            pl.BlockSpec((1, 1, f_p), lambda t, b: (t, 0, 0)),
            pl.BlockSpec((1, f_p, fc_p), lambda t, b: (t, 0, 0)),
            pl.BlockSpec((1, 1, fc_p), lambda t, b: (t, 0, 0)),
        ],
        out_specs=pl.BlockSpec((1, block_batch, fc_p), lambda t, b: (t, b, 0)),
        compiler_params=pltpu.CompilerParams(
            dimension_semantics=("parallel", "parallel")),
    )(emb, conv_w, conv_b, fc_w, fc_b)


def deepconn_forward(params, user_doc, item_doc, kernel_size, block_batch=None):
    """Full DeepCoNNModel.forward equivalent.

    user_doc, item_doc: (B, doc_len) int32 token ids.
    Returns (user_out, item_out), each (B, 1, fc_dim)  [torch.stack([x], 1)].
    """
    B, doc_len = user_doc.shape
    word_dim = params["user_word_embs"].shape[1]
    filters_num = params["user_cnn_b"].shape[-1]
    fc_dim = params["user_fc_b"].shape[-1]

    l_out = doc_len - kernel_size + 1                      # 'valid' conv length
    l_out_p = _round_up(l_out, _SUBLANE)                   # sublane-aligned time
    doc_len_p = l_out_p + kernel_size - 1
    f_p = _round_up(filters_num, _LANE)                    # lane-dense filters
    fc_p = _round_up(fc_dim, _LANE)                        # lane-dense FC out
    kd = kernel_size * word_dim

    if block_batch is None:
        block_batch = _pick_block_batch(B, doc_len_p, word_dim)
    b_p = _round_up(B, block_batch)

    # Pad token ids in batch and time (pad id 0 is a valid row; padded time
    # positions are masked in-kernel, padded batch rows are sliced away).
    def pad_ids(doc):
        return jnp.pad(doc, ((0, b_p - B), (0, doc_len_p - doc_len)))

    # Embedding gather in plain JAX (see TODO at top about fusing it).
    user_emb = params["user_word_embs"][pad_ids(user_doc)]
    item_emb = params["item_word_embs"][pad_ids(item_doc)]
    emb = jnp.stack([user_emb, item_emb], axis=0).astype(jnp.bfloat16)

    # Per-tower weight prep: conv weight -> im2col layout (K*D, F_p), bf16;
    # zero-pad filters/fc lanes so padded channels contribute exactly 0.
    def prep(cw, cb, fw, fb):
        cw2 = jnp.pad(cw.reshape(kd, filters_num),
                      ((0, 0), (0, f_p - filters_num))).astype(jnp.bfloat16)
        cb2 = jnp.pad(cb, ((0, 0), (0, f_p - filters_num)))
        fw2 = jnp.pad(fw, ((0, f_p - filters_num),
                           (0, fc_p - fc_dim))).astype(jnp.bfloat16)
        fb2 = jnp.pad(fb, ((0, 0), (0, fc_p - fc_dim)))
        return cw2, cb2, fw2, fb2

    u = prep(params["user_cnn_w"], params["user_cnn_b"],
             params["user_fc_w"], params["user_fc_b"])
    it = prep(params["item_cnn_w"], params["item_cnn_b"],
              params["item_fc_w"], params["item_fc_b"])
    conv_w = jnp.stack([u[0], it[0]], 0)                   # (2, K*D, F_p)
    conv_b = jnp.stack([u[1], it[1]], 0)                   # (2, 1,   F_p)
    fc_w = jnp.stack([u[2], it[2]], 0)                     # (2, F_p, fc_p)
    fc_b = jnp.stack([u[3], it[3]], 0)                     # (2, 1,   fc_p)

    out = _towers_call(emb, conv_w, conv_b, fc_w, fc_b, kernel_size,
                       l_out, l_out_p, block_batch)        # (2, B_p, fc_p)

    user_out = out[0, :B, :fc_dim][:, None, :]             # torch.stack([x], 1)
    item_out = out[1, :B, :fc_dim][:, None, :]
    return user_out, item_out


def init_params(key, vocab_size, word_dim, kernel_size, filters_num, fc_dim):
    ks = jax.random.split(key, 8)
    # Xavier-normal std for Conv2d(1, F, (K, D)): fan_in = K*D, fan_out = F*K*D
    xavier_std = (2.0 / (1 * kernel_size * word_dim
                         + filters_num * kernel_size * word_dim)) ** 0.5
    params = {
        "user_word_embs": jax.random.uniform(
            ks[0], (vocab_size, word_dim), jnp.float32, -0.1, 0.1),
        "item_word_embs": jax.random.uniform(
            ks[1], (vocab_size, word_dim), jnp.float32, -0.1, 0.1),
        "user_cnn_w": jax.random.normal(
            ks[2], (kernel_size, word_dim, filters_num), jnp.float32) * xavier_std,
        "item_cnn_w": jax.random.normal(
            ks[3], (kernel_size, word_dim, filters_num), jnp.float32) * xavier_std,
        "user_cnn_b": jnp.full((1, filters_num), 0.1, jnp.float32),
        "item_cnn_b": jnp.full((1, filters_num), 0.1, jnp.float32),
        "user_fc_w": jax.random.uniform(
            ks[4], (filters_num, fc_dim), jnp.float32, -0.1, 0.1),
        "item_fc_w": jax.random.uniform(
            ks[5], (filters_num, fc_dim), jnp.float32, -0.1, 0.1),
        "user_fc_b": jnp.full((1, fc_dim), 0.1, jnp.float32),
        "item_fc_b": jnp.full((1, fc_dim), 0.1, jnp.float32),
    }
    return params


def _reference(params, user_doc, item_doc, kernel_size):
    """Pure-JAX f32 reference of DeepCoNNModel.forward (eval mode)."""
    def tower(tbl, cw, cb, fw, fb, doc):
        e = tbl[doc]                                       # (B, L, D)
        L = e.shape[1]
        l_out = L - kernel_size + 1
        taps = [e[:, k:k + l_out, :] for k in range(kernel_size)]
        x = jnp.concatenate(taps, axis=-1)                 # (B, l_out, K*D)
        h = jnp.einsum("bld,df->blf", x, cw.reshape(-1, cw.shape[-1]))
        h = jax.nn.relu(h + cb)                            # bias + ReLU
        feat = h.max(axis=1)                               # time max-pool
        return feat @ fw + fb
    u = tower(params["user_word_embs"], params["user_cnn_w"],
              params["user_cnn_b"], params["user_fc_w"], params["user_fc_b"],
              user_doc)
    i = tower(params["item_word_embs"], params["item_cnn_w"],
              params["item_cnn_b"], params["item_fc_w"], params["item_fc_b"],
              item_doc)
    return u[:, None, :], i[:, None, :]


if __name__ == "__main__":
    # Small synthetic config: vocab_size=100, word_dim=32, kernel_size=3,
    # filters_num=16, fc_dim=8, doc_len=32, batch=2.
    B, doc_len = 2, 32
    vocab_size, word_dim = 100, 32
    kernel_size, filters_num, fc_dim = 3, 16, 8

    key = jax.random.PRNGKey(0)
    pkey, dkey_u, dkey_i = jax.random.split(key, 3)
    params = init_params(pkey, vocab_size, word_dim,
                         kernel_size, filters_num, fc_dim)

    user_doc = jax.random.randint(dkey_u, (B, doc_len), 0, vocab_size,
                                  dtype=jnp.int32)
    item_doc = jax.random.randint(dkey_i, (B, doc_len), 0, vocab_size,
                                  dtype=jnp.int32)

    fwd = jax.jit(functools.partial(deepconn_forward, kernel_size=kernel_size))
    user_out, item_out = fwd(params, user_doc, item_doc)
    jax.block_until_ready((user_out, item_out))

    assert user_out.shape == (B, 1, fc_dim)
    assert item_out.shape == (B, 1, fc_dim)

    # Numerical check against the f32 pure-JAX reference (kernel runs bf16
    # matmuls with f32 accumulation -> loose-ish tolerance).
    ref_u, ref_i = _reference(params, user_doc, item_doc, kernel_size)
    np.testing.assert_allclose(np.asarray(user_out), np.asarray(ref_u),
                               rtol=1e-2, atol=1e-2)
    np.testing.assert_allclose(np.asarray(item_out), np.asarray(ref_i),
                               rtol=1e-2, atol=1e-2)

    print("KERNEL_OK")
</pallas_src>

<mosaic_0001>
module attributes {stable_mosaic.version = 11 : i64} {
  func.func @kernel(%arg0: i32, %arg1: i32, %arg2: memref<1x8x34x32xbf16, #tpu.memory_space<vmem>>, %arg3: memref<1x96x128xbf16, #tpu.memory_space<vmem>>, %arg4: memref<1x1x128xf32, #tpu.memory_space<vmem>>, %arg5: memref<1x128x128xbf16, #tpu.memory_space<vmem>>, %arg6: memref<1x1x128xf32, #tpu.memory_space<vmem>>, %arg7: memref<1x8x128xf32, #tpu.memory_space<vmem>>) attributes {dimension_semantics = [#tpu.dimension_semantics<parallel>, #tpu.dimension_semantics<parallel>], iteration_bounds = array<i64: 2, 1>, scalar_prefetch = 0 : i64, scratch_operands = 0 : i64, tpu.core_type = #tpu.core_type<tc>, window_params = [{transform_indices = @transform_0, window_bounds = array<i64: 1, 8, 34, 32>}, {transform_indices = @transform_1, window_bounds = array<i64: 1, 96, 128>}, {transform_indices = @transform_2, window_bounds = array<i64: 1, 1, 128>}, {transform_indices = @transform_3, window_bounds = array<i64: 1, 128, 128>}, {transform_indices = @transform_4, window_bounds = array<i64: 1, 1, 128>}, {transform_indices = @transform_5, window_bounds = array<i64: 1, 8, 128>}]} {
    %c0 = arith.constant 0 : index
    %c0_0 = arith.constant 0 : index
    %c0_1 = arith.constant 0 : index
    %c0_2 = arith.constant 0 : index
    %0 = vector.load %arg2[%c0, %c0_0, %c0_1, %c0_2] : memref<1x8x34x32xbf16, #tpu.memory_space<vmem>>, vector<1x8x34x32xbf16>
    %1 = vector.shape_cast %0 : vector<1x8x34x32xbf16> to vector<8x34x32xbf16>
    %2 = vector.extract_strided_slice %1 {offsets = [0, 0, 0], sizes = [8, 32, 32], strides = [1, 1, 1]} : vector<8x34x32xbf16> to vector<8x32x32xbf16>
    %3 = vector.extract_strided_slice %1 {offsets = [0, 1, 0], sizes = [8, 32, 32], strides = [1, 1, 1]} : vector<8x34x32xbf16> to vector<8x32x32xbf16>
    %4 = vector.extract_strided_slice %1 {offsets = [0, 2, 0], sizes = [8, 32, 32], strides = [1, 1, 1]} : vector<8x34x32xbf16> to vector<8x32x32xbf16>
    %5 = tpu.concatenate %2, %3, %4 in 2 : vector<8x32x32xbf16>, vector<8x32x32xbf16>, vector<8x32x32xbf16> -> vector<8x32x96xbf16>
    %6 = vector.shape_cast %5 : vector<8x32x96xbf16> to vector<256x96xbf16>
    %c0_3 = arith.constant 0 : index
    %c0_4 = arith.constant 0 : index
    %c0_5 = arith.constant 0 : index
    %7 = vector.load %arg3[%c0_3, %c0_4, %c0_5] : memref<1x96x128xbf16, #tpu.memory_space<vmem>>, vector<1x96x128xbf16>
    %8 = vector.shape_cast %7 : vector<1x96x128xbf16> to vector<96x128xbf16>
    %cst = arith.constant dense<0.000000e+00> : vector<256x128xf32>
    %9 = tpu.matmul %6, %8, %cst {dimension_numbers = #tpu.dot_dimension_numbers<[1], [0], [0], [1], [0, 0, 1, 1], [], []>} : vector<256x96xbf16>, vector<96x128xbf16>, vector<256x128xf32> -> vector<256x128xf32>
    %c0_6 = arith.constant 0 : index
    %c0_7 = arith.constant 0 : index
    %c0_8 = arith.constant 0 : index
    %10 = vector.load %arg4[%c0_6, %c0_7, %c0_8] : memref<1x1x128xf32, #tpu.memory_space<vmem>>, vector<1x1x128xf32>
    %11 = vector.shape_cast %10 : vector<1x1x128xf32> to vector<1x128xf32>
    %12 = vector.broadcast %11 : vector<1x128xf32> to vector<256x128xf32>
    %13 = arith.addf %9, %12 : vector<256x128xf32>
    %cst_9 = arith.constant 0.000000e+00 : f32
    %14 = vector.broadcast %cst_9 : f32 to vector<256x128xf32>
    %15 = arith.maximumf %13, %14 : vector<256x128xf32>
    %16 = vector.shape_cast %15 : vector<256x128xf32> to vector<8x32x128xf32>
    %17 = tpu.iota {dimensions = array<i32: 1>} : vector<8x32x128xi32>
    %c30_i32 = arith.constant 30 : i32
    %18 = vector.broadcast %c30_i32 : i32 to vector<8x32x128xi32>
    %19 = arith.cmpi slt, %17, %18 : vector<8x32x128xi32>
    %cst_10 = arith.constant 0xFF800000 : f32
    %20 = vector.broadcast %cst_10 : f32 to vector<8x32x128xf32>
    %21 = arith.select %19, %16, %20 : vector<8x32x128xi1>, vector<8x32x128xf32>
    %cst_11 = arith.constant dense<0xFF800000> : vector<8x128xf32>
    %22 = vector.multi_reduction <maximumf>, %21, %cst_11 [1] : vector<8x32x128xf32> to vector<8x128xf32>
    %23 = arith.truncf %22 : vector<8x128xf32> to vector<8x128xbf16>
    %c0_12 = arith.constant 0 : index
    %c0_13 = arith.constant 0 : index
    %c0_14 = arith.constant 0 : index
    %24 = vector.load %arg5[%c0_12, %c0_13, %c0_14] : memref<1x128x128xbf16, #tpu.memory_space<vmem>>, vector<1x128x128xbf16>
    %25 = vector.shape_cast %24 : vector<1x128x128xbf16> to vector<128x128xbf16>
    %cst_15 = arith.constant dense<0.000000e+00> : vector<8x128xf32>
    %26 = tpu.matmul %23, %25, %cst_15 {dimension_numbers = #tpu.dot_dimension_numbers<[1], [0], [0], [1], [0, 0, 1, 1], [], []>} : vector<8x128xbf16>, vector<128x128xbf16>, vector<8x128xf32> -> vector<8x128xf32>
    %c0_16 = arith.constant 0 : index
    %c0_17 = arith.constant 0 : index
    %c0_18 = arith.constant 0 : index
    %27 = vector.load %arg6[%c0_16, %c0_17, %c0_18] : memref<1x1x128xf32, #tpu.memory_space<vmem>>, vector<1x1x128xf32>
    %28 = vector.shape_cast %27 : vector<1x1x128xf32> to vector<1x128xf32>
    %29 = vector.broadcast %28 : vector<1x128xf32> to vector<8x128xf32>
    %30 = arith.addf %26, %29 : vector<8x128xf32>
    %c0_19 = arith.constant 0 : index
    %c0_20 = arith.constant 0 : index
    %c0_21 = arith.constant 0 : index
    %31 = vector.load %arg7[%c0_19, %c0_20, %c0_21] : memref<1x8x128xf32, #tpu.memory_space<vmem>>, vector<1x8x128xf32>
    %32 = vector.shape_cast %31 : vector<1x8x128xf32> to vector<8x128xf32>
    %33 = vector.shape_cast %30 : vector<8x128xf32> to vector<1x8x128xf32>
    tpu.vector_store %arg7[%c0_19, %c0_20, %c0_21], %33 {strides = array<i32>} : memref<1x8x128xf32, #tpu.memory_space<vmem>>, vector<1x8x128xf32>,
    return
  }
  func.func @transform_0(%arg0: i32, %arg1: i32) -> (i32, i32, i32, i32) {
    %c0_i32 = arith.constant 0 : i32
    %c0_i32_0 = arith.constant 0 : i32
    %c0_i32_1 = arith.constant 0 : i32
    return %arg0, %arg1, %c0_i32, %c0_i32_0 : i32, i32, i32, i32
  }
  func.func @transform_1(%arg0: i32, %arg1: i32) -> (i32, i32, i32) {
    %c0_i32 = arith.constant 0 : i32
    %c0_i32_0 = arith.constant 0 : i32
    %c0_i32_1 = arith.constant 0 : i32
    return %arg0, %c0_i32, %c0_i32_0 : i32, i32, i32
  }
  func.func @transform_2(%arg0: i32, %arg1: i32) -> (i32, i32, i32) {
    %c0_i32 = arith.constant 0 : i32
    %c0_i32_0 = arith.constant 0 : i32
    %c0_i32_1 = arith.constant 0 : i32
    return %arg0, %c0_i32, %c0_i32_0 : i32, i32, i32
  }
  func.func @transform_3(%arg0: i32, %arg1: i32) -> (i32, i32, i32) {
    %c0_i32 = arith.constant 0 : i32
    %c0_i32_0 = arith.constant 0 : i32
    %c0_i32_1 = arith.constant 0 : i32
    return %arg0, %c0_i32, %c0_i32_0 : i32, i32, i32
  }
  func.func @transform_4(%arg0: i32, %arg1: i32) -> (i32, i32, i32) {
    %c0_i32 = arith.constant 0 : i32
    %c0_i32_0 = arith.constant 0 : i32
    %c0_i32_1 = arith.constant 0 : i32
    return %arg0, %c0_i32, %c0_i32_0 : i32, i32, i32
  }
  func.func @transform_5(%arg0: i32, %arg1: i32) -> (i32, i32, i32) {
    %c0_i32 = arith.constant 0 : i32
    %c0_i32_0 = arith.constant 0 : i32
    return %arg0, %arg1, %c0_i32 : i32, i32, i32
  }
}

</mosaic_0001>

<llo_original>
// kernel: deepconn_forward.1
$region0: #{deepconn_forward.1}
  #allocation0 [shape = 'u32[]', space=smem, size = 0x4, offset = 0x4, fixed_abs, tag = 'smem constant byte address 0x4 - core index']
  #allocation1 [shape = 'u32[72,128]{1,0:T(1,128)}', space=vmem, size = 0x9000, scoped, tag = 'internal scratch']
  %s0 = inlined_call_operand.vmem [shape: bf16[2,8,34,32], index: 0, kind: input, shape index: {}]
  %s1 = inlined_call_operand.vmem [shape: bf16[2,96,128], index: 1, kind: input, shape index: {}]
  %s2 = inlined_call_operand.vmem [shape: f32[2,1,128], index: 2, kind: input, shape index: {}]
  %s3 = inlined_call_operand.vmem [shape: bf16[2,128,128], index: 3, kind: input, shape index: {}]
  %s4 = inlined_call_operand.vmem [shape: f32[2,1,128], index: 4, kind: input, shape index: {}]
  %s5 = inlined_call_operand.vmem [shape: f32[2,8,128], index: 5, kind: output, shape index: {}]
  %s6 = sld [smem:[#allocation0]]
  $region53: #{deepconn_forward.1} parent=0
    _
  %s8 = ssub.s32 1, %s6
  %s9 = scalar_select 0, %s8, %s6
  loop: start=0, step=1, limit=4
  $region2: #{deepconn_forward.1} parent=0 // loop_pre_header
    _
  $region3: #{deepconn_forward.1} parent=0 // loop_header
    %s11 = sphi 0, %s15
    %p12 = scmp.ge.s32.totalorder %s11, 4
    %s18 = sphi 0, %s30
    %s19 = sphi 0, %s26
    %s20 = sphi 0, %s18
    %s21 = sphi 0, %s19
    %s22 = sphi 0, %s20
    %s23 = sphi 0, %s21
    %s35 = sphi 0, %s37
    %s38 = sphi 0, %s35
    %s39 = sphi 0, %s38
    %s55 = sphi 0, %s39
    %s61 = sphi 0, %s63
    %s64 = sphi 0, %s61
    %s65 = sphi 0, %s64
    %s81 = sphi 0, %s65
    %s87 = sphi 0, %s89
    %s90 = sphi 0, %s87
    %s91 = sphi 0, %s90
    %s107 = sphi 0, %s91
    %s113 = sphi 0, %s115
    %s116 = sphi 0, %s113
    %s117 = sphi 0, %s116
    %s133 = sphi 0, %s117
    %s139 = sphi 0, %s141
    %s142 = sphi 0, %s139
    %s143 = sphi 0, %s142
    %s159 = sphi 0, %s143
    %s167 = sphi 0, %s169
    %s170 = sphi 0, %s167
    %s171 = sphi 0, %s170
    %s187 = sphi 0, %s171
  $region4: #{deepconn_forward.1} parent=0 // loop_header_branch
    %14 = sbr.rel (%p12) target = $region8
  $region5: #{deepconn_forward.1} parent=0 // loop_body
    %s16 = ssub.s32 %s11, 1
    %s17 = ssub.s32 %s11, 2
    %s24 = sadd.s32 1, %s19
    %p25 = scmp.ge.s32.totalorder %s24, 1
    %s26 = scalar_select %p25, 0, %s24
    %s27 = sadd.s32 1, %s18
    %s28 = scalar_select %p25, %s27, %s18
    %p29 = scmp.ge.s32.totalorder %s28, 2
    %s30 = scalar_select %p29, 0, %s28
    %s31 = ssub.s32 %s18, %s30
    %s32 = ssub.s32 %s19, %s26
    %s33 = sor.u32 %s31, %s32
    %p34 = scmp.eq.s32.totalorder %s33, 0
    %s36 = sadd.s32 %s35, 1
    %s37 = scalar_select %p34, %s35, %s36
    %p40 = pneg %p34
    %p41 = scmp.eq.s32.totalorder %s11, 1
    %p42 = por %p40, %p41
    %p43 = scmp.ne.s32.totalorder %s35, %s38
    %p44 = scmp.eq.s32.totalorder %s11, 0
    %p45 = por %p43, %p44
    %p46 = scmp.ne.s32.totalorder %s35, %s38
    %p47 = scmp.eq.s32.totalorder %s16, 1
    %p48 = por %p46, %p47
    %p49 = scmp.ne.s32.totalorder %s38, %s39
    %p50 = scmp.eq.s32.totalorder %s16, 0
    %p51 = por %p49, %p50
    %p52 = scmp.ne.s32.totalorder %s38, %s39
    %p53 = scmp.eq.s32.totalorder %s17, 1
    %p54 = por %p52, %p53
    %p56 = scmp.ne.s32.totalorder %s39, %s55
    %p57 = scmp.eq.s32.totalorder %s17, 0
    %p58 = por %p56, %p57
    %s59 = ssub.s32 %s18, %s30
    %p60 = scmp.eq.s32.totalorder %s59, 0
    %s62 = sadd.s32 %s61, 1
    %s63 = scalar_select %p60, %s61, %s62
    %p66 = pneg %p60
    %p67 = scmp.eq.s32.totalorder %s11, 1
    %p68 = por %p66, %p67
    %p69 = scmp.ne.s32.totalorder %s61, %s64
    %p70 = scmp.eq.s32.totalorder %s11, 0
    %p71 = por %p69, %p70
    %p72 = scmp.ne.s32.totalorder %s61, %s64
    %p73 = scmp.eq.s32.totalorder %s16, 1
    %p74 = por %p72, %p73
    %p75 = scmp.ne.s32.totalorder %s64, %s65
    %p76 = scmp.eq.s32.totalorder %s16, 0
    %p77 = por %p75, %p76
    %p78 = scmp.ne.s32.totalorder %s64, %s65
    %p79 = scmp.eq.s32.totalorder %s17, 1
    %p80 = por %p78, %p79
    %p82 = scmp.ne.s32.totalorder %s65, %s81
    %p83 = scmp.eq.s32.totalorder %s17, 0
    %p84 = por %p82, %p83
    %s85 = ssub.s32 %s18, %s30
    %p86 = scmp.eq.s32.totalorder %s85, 0
    %s88 = sadd.s32 %s87, 1
    %s89 = scalar_select %p86, %s87, %s88
    %p92 = pneg %p86
    %p93 = scmp.eq.s32.totalorder %s11, 1
    %p94 = por %p92, %p93
    %p95 = scmp.ne.s32.totalorder %s87, %s90
    %p96 = scmp.eq.s32.totalorder %s11, 0
    %p97 = por %p95, %p96
    %p98 = scmp.ne.s32.totalorder %s87, %s90
    %p99 = scmp.eq.s32.totalorder %s16, 1
    %p100 = por %p98, %p99
    %p101 = scmp.ne.s32.totalorder %s90, %s91
    %p102 = scmp.eq.s32.totalorder %s16, 0
    %p103 = por %p101, %p102
    %p104 = scmp.ne.s32.totalorder %s90, %s91
    %p105 = scmp.eq.s32.totalorder %s17, 1
    %p106 = por %p104, %p105
    %p108 = scmp.ne.s32.totalorder %s91, %s107
    %p109 = scmp.eq.s32.totalorder %s17, 0
    %p110 = por %p108, %p109
    %s111 = ssub.s32 %s18, %s30
    %p112 = scmp.eq.s32.totalorder %s111, 0
    %s114 = sadd.s32 %s113, 1
    %s115 = scalar_select %p112, %s113, %s114
    %p118 = pneg %p112
    %p119 = scmp.eq.s32.totalorder %s11, 1
    %p120 = por %p118, %p119
    %p121 = scmp.ne.s32.totalorder %s113, %s116
    %p122 = scmp.eq.s32.totalorder %s11, 0
    %p123 = por %p121, %p122
    %p124 = scmp.ne.s32.totalorder %s113, %s116
    %p125 = scmp.eq.s32.totalorder %s16, 1
    %p126 = por %p124, %p125
    %p127 = scmp.ne.s32.totalorder %s116, %s117
    %p128 = scmp.eq.s32.totalorder %s16, 0
    %p129 = por %p127, %p128
    %p130 = scmp.ne.s32.totalorder %s116, %s117
    %p131 = scmp.eq.s32.totalorder %s17, 1
    %p132 = por %p130, %p131
    %p134 = scmp.ne.s32.totalorder %s117, %s133
    %p135 = scmp.eq.s32.totalorder %s17, 0
    %p136 = por %p134, %p135
    %s137 = ssub.s32 %s18, %s30
    %p138 = scmp.eq.s32.totalorder %s137, 0
    %s140 = sadd.s32 %s139, 1
    %s141 = scalar_select %p138, %s139, %s140
    %p144 = pneg %p138
    %p145 = scmp.eq.s32.totalorder %s11, 1
    %p146 = por %p144, %p145
    %p147 = scmp.ne.s32.totalorder %s139, %s142
    %p148 = scmp.eq.s32.totalorder %s11, 0
    %p149 = por %p147, %p148
    %p150 = scmp.ne.s32.totalorder %s139, %s142
    %p151 = scmp.eq.s32.totalorder %s16, 1
    %p152 = por %p150, %p151
    %p153 = scmp.ne.s32.totalorder %s142, %s143
    %p154 = scmp.eq.s32.totalorder %s16, 0
    %p155 = por %p153, %p154
    %p156 = scmp.ne.s32.totalorder %s142, %s143
    %p157 = scmp.eq.s32.totalorder %s17, 1
    %p158 = por %p156, %p157
    %p160 = scmp.ne.s32.totalorder %s143, %s159
    %p161 = scmp.eq.s32.totalorder %s17, 0
    %p162 = por %p160, %p161
    %s163 = ssub.s32 %s18, %s30
    %s164 = ssub.s32 %s19, %s26
    %s165 = sor.u32 %s163, %s164
    %p166 = scmp.eq.s32.totalorder %s165, 0
    %s168 = sadd.s32 %s167, 1
    %s169 = scalar_select %p166, %s167, %s168
    %p172 = pneg %p166
    %p173 = scmp.eq.s32.totalorder %s11, 1
    %p174 = por %p172, %p173
    %p175 = scmp.ne.s32.totalorder %s167, %s170
    %p176 = scmp.eq.s32.totalorder %s11, 0
    %p177 = por %p175, %p176
    %p178 = scmp.ne.s32.totalorder %s167, %s170
    %p179 = scmp.eq.s32.totalorder %s16, 1
    %p180 = por %p178, %p179
    %p181 = scmp.ne.s32.totalorder %s170, %s171
    %p182 = scmp.eq.s32.totalorder %s16, 0
    %p183 = por %p181, %p182
    %p184 = scmp.ne.s32.totalorder %s170, %s171
    %p185 = scmp.eq.s32.totalorder %s17, 1
    %p186 = por %p184, %p185
    %p188 = scmp.ne.s32.totalorder %s171, %s187
    %p189 = scmp.eq.s32.totalorder %s17, 0
    %p190 = por %p188, %p189
    %p191 = scmp.le.s32.totalorder 1, %s11
    %p192 = scmp.lt.s32.totalorder %s11, 3
    %p193 = pnand %p191, %p192
    %p194 = pneg %p193
    // Predicated region
    $region9: #{deepconn_forward.1} parent=5 // pred_check
      _
    $region10: #{deepconn_forward.1} parent=5 // pred_check_branch
      %196 = sbr.rel (%p193) target = $region12
    $region11: #{deepconn_forward.1} parent=5 // pred_region
      %s197 = ssub.s32 %s11, 1
    $region12: #{deepconn_forward.1} parent=5 // pred_fallthru
      _
    %p198 = scmp.lt.s32.totalorder %s11, 2
    // Predicated region
    $region13: #{deepconn_forward.1} parent=5 // pred_check
      %p199 = pneg %p198
    $region14: #{deepconn_forward.1} parent=5 // pred_check_branch
      %201 = sbr.rel (%p199) target = $region16
    $region15: #{deepconn_forward.1} parent=5 // pred_region
      // Predicated region
      $region17: #{deepconn_forward.1} parent=15 // pred_check
        %p202 = pneg %p45
      $region18: #{deepconn_forward.1} parent=15 // pred_check_branch
        %204 = sbr.rel (%p202) target = $region20
      $region19: #{deepconn_forward.1} parent=15 // pred_region
        %s205 = smul.u32 8, %s19
        %p206 = scmp.lt.s32.totalorder %s18, 1
        %s207 = scalar_select %p206, %s18, 1
        %p208 = scmp.lt.s32.totalorder %s205, 7
        %s209 = scalar_select %p208, %s205, 7
        %s210 = smul.addr %s209, 5
        %s211 = smul.addr %s207, 40
        %s212 = sadd.s32 %s210, %s211
        %s213 = smul.addr %s212, 4
        %s214 = scalar_lea.vmem %s0, %s213
        %s215 = smul.u32 8, %s19
      $region20: #{deepconn_forward.1} parent=15 // pred_fallthru
        _
      // Predicated region
      $region21: #{deepconn_forward.1} parent=15 // pred_check
        %p216 = pneg %p71
      $region22: #{deepconn_forward.1} parent=15 // pred_check_branch
        %218 = sbr.rel (%p216) target = $region24
      $region23: #{deepconn_forward.1} parent=15 // pred_region
        %p219 = scmp.lt.s32.totalorder %s18, 1
        %s220 = scalar_select %p219, %s18, 1
        %s221 = smul.addr %s220, 12
        %s222 = smul.addr %s221, 4
        %s223 = scalar_lea.vmem %s1, %s222
      $region24: #{deepconn_forward.1} parent=15 // pred_fallthru
        _
      // Predicated region
      $region25: #{deepconn_forward.1} parent=15 // pred_check
        %p224 = pneg %p97
      $region26: #{deepconn_forward.1} parent=15 // pred_check_branch
        %226 = sbr.rel (%p224) target = $region28
      $region27: #{deepconn_forward.1} parent=15 // pred_region
        %p227 = scmp.lt.s32.totalorder %s18, 1
        %s228 = scalar_select %p227, %s18, 1
        %s229 = scalar_lea.vmem %s2, %s228
      $region28: #{deepconn_forward.1} parent=15 // pred_fallthru
        _
      // Predicated region
      $region29: #{deepconn_forward.1} parent=15 // pred_check
        %p230 = pneg %p123
      $region30: #{deepconn_forward.1} parent=15 // pred_check_branch
        %232 = sbr.rel (%p230) target = $region32
      $region31: #{deepconn_forward.1} parent=15 // pred_region
        %p233 = scmp.lt.s32.totalorder %s18, 1
        %s234 = scalar_select %p233, %s18, 1
        %s235 = smul.addr %s234, 16
        %s236 = smul.addr %s235, 4
        %s237 = scalar_lea.vmem %s3, %s236
      $region32: #{deepconn_forward.1} parent=15 // pred_fallthru
        _
      // Predicated region
      $region33: #{deepconn_forward.1} parent=15 // pred_check
        %p238 = pneg %p149
      $region34: #{deepconn_forward.1} parent=15 // pred_check_branch
        %240 = sbr.rel (%p238) target = $region36
      $region35: #{deepconn_forward.1} parent=15 // pred_region
        %p241 = scmp.lt.s32.totalorder %s18, 1
        %s242 = scalar_select %p241, %s18, 1
        %s243 = scalar_lea.vmem %s4, %s242
      $region36: #{deepconn_forward.1} parent=15 // pred_fallthru
        _
    $region16: #{deepconn_forward.1} parent=5 // pred_fallthru
      _
    %p244 = scmp.le.s32.totalorder 1, %s11
    %p245 = scmp.lt.s32.totalorder %s11, 3
    %p246 = pnand %p244, %p245
    %p247 = pneg %p246
    // Predicated region
    $region37: #{deepconn_forward.1} parent=5 // pred_check
      _
    $region38: #{deepconn_forward.1} parent=5 // pred_check_branch
      %249 = sbr.rel (%p246) target = $region40
    $region39: #{deepconn_forward.1} parent=5 // pred_region
      %s250 = ssub.s32 %s11, 1
      %s251 = smul.u32 8, %s21
      %p252 = scmp.lt.s32.totalorder %s20, 1
      %s253 = scalar_select %p252, %s20, 1
      %p254 = scmp.lt.s32.totalorder %s251, 7
      %s255 = scalar_select %p254, %s251, 7
      %s256 = smul.addr %s255, 5
      %s257 = smul.addr %s253, 40
      %s258 = sadd.s32 %s256, %s257
      %s259 = smul.addr %s258, 4
      %s260 = scalar_lea.vmem %s0, %s259
      %p261 = pneg %p51
      %p262 = pneg %p48
      %p263 = scmp.lt.s32.totalorder %s20, 1
      %s264 = scalar_select %p263, %s20, 1
      %s265 = smul.addr %s264, 12
      %s266 = smul.addr %s265, 4
      %s267 = scalar_lea.vmem %s1, %s266
      %p268 = pneg %p77
      %p269 = pneg %p74
      %p270 = scmp.lt.s32.totalorder %s20, 1
      %s271 = scalar_select %p270, %s20, 1
      %s272 = scalar_lea.vmem %s2, %s271
      %p273 = pneg %p103
      %p274 = pneg %p100
      %p275 = scmp.lt.s32.totalorder %s20, 1
      %s276 = scalar_select %p275, %s20, 1
      %s277 = smul.addr %s276, 16
      %s278 = smul.addr %s277, 4
      %s279 = scalar_lea.vmem %s3, %s278
      %p280 = pneg %p129
      %p281 = pneg %p126
      %p282 = scmp.lt.s32.totalorder %s20, 1
      %s283 = scalar_select %p282, %s20, 1
      %s284 = scalar_lea.vmem %s4, %s283
      %p285 = pneg %p155
      %p286 = pneg %p152
      %p287 = pneg %p183
      %p288 = pneg %p180
      %p289 = scmp.lt.s32.totalorder %s20, 1
      %s290 = scalar_select %p289, %s20, 1
      %p291 = scmp.lt.s32.totalorder %s21, 0
      %s292 = scalar_select %p291, %s21, 0
      %s293 = sadd.s32 %s292, %s290
      %s294 = smul.addr %s293, 8
      %s295 = scalar_lea.vmem %s5, %s294
      %s296 = smul.u32 8, %s21
      %p297 = scmp.lt.s32.totalorder %s20, 1
      %s298 = scalar_select %p297, %s20, 1
      %p299 = scmp.lt.s32.totalorder %s296, 7
      %s300 = scalar_select %p299, %s296, 7
      %s301 = smul.addr %s300, 5
      %s302 = smul.addr %s298, 40
      %s303 = sadd.s32 %s301, %s302
      %s304 = smul.addr %s303, 4
      %s305 = scalar_lea.vmem %s0, %s304
      %s306 = smul.u32 8, %s21
      %p307 = scmp.lt.s32.totalorder %s20, 1
      %s308 = scalar_select %p307, %s20, 1
      %s309 = smul.addr %s308, 12
      %s310 = smul.addr %s309, 4
      %s311 = scalar_lea.vmem %s1, %s310
      %p312 = scmp.lt.s32.totalorder %s20, 1
      %s313 = scalar_select %p312, %s20, 1
      %s314 = scalar_lea.vmem %s2, %s313
      %p315 = scmp.lt.s32.totalorder %s20, 1
      %s316 = scalar_select %p315, %s20, 1
      %s317 = smul.addr %s316, 16
      %s318 = smul.addr %s317, 4
      %s319 = scalar_lea.vmem %s3, %s318
      %p320 = scmp.lt.s32.totalorder %s20, 1
      %s321 = scalar_select %p320, %s20, 1
      %s322 = scalar_lea.vmem %s4, %s321
      %p323 = scmp.lt.s32.totalorder %s20, 1
      %s324 = scalar_select %p323, %s20, 1
      %p325 = scmp.lt.s32.totalorder %s21, 0
      %s326 = scalar_select %p325, %s21, 0
      %s327 = sadd.s32 %s326, %s324
      %s328 = smul.addr %s327, 8
      %s329 = scalar_lea.vmem %s5, %s328
      %v331 = vld [vmem:[%s305] sm:$0xf]
      %v332 = vld [vmem:[%s305 + $0x4] sm:$0xf]
      %v333 = vld [vmem:[%s305 + $0x8] sm:$0xf]
      %v334 = vld [vmem:[%s305 + $0xc] sm:$0xf]
      %v335 = vld [vmem:[%s305 + $0x10] sm:$0x1]
      %v336 = vld [vmem:[%s305 + $0x14] sm:$0xf]
      %v337 = vld [vmem:[%s305 + $0x18] sm:$0xf]
      %v338 = vld [vmem:[%s305 + $0x1c] sm:$0xf]
      %v339 = vld [vmem:[%s305 + $0x20] sm:$0xf]
      %v340 = vld [vmem:[%s305 + $0x24] sm:$0x1]
      %v341 = vld [vmem:[%s305 + $0x28] sm:$0xf]
      %v342 = vld [vmem:[%s305 + $0x2c] sm:$0xf]
      %v343 = vld [vmem:[%s305 + $0x30] sm:$0xf]
      %v344 = vld [vmem:[%s305 + $0x34] sm:$0xf]
      %v345 = vld [vmem:[%s305 + $0x38] sm:$0x1]
      %v346 = vld [vmem:[%s305 + $0x3c] sm:$0xf]
      %v347 = vld [vmem:[%s305 + $0x40] sm:$0xf]
      %v348 = vld [vmem:[%s305 + $0x44] sm:$0xf]
      %v349 = vld [vmem:[%s305 + $0x48] sm:$0xf]
      %v350 = vld [vmem:[%s305 + $0x4c] sm:$0x1]
      %v351 = vld [vmem:[%s305 + $0x50] sm:$0xf]
      %v352 = vld [vmem:[%s305 + $0x54] sm:$0xf]
      %v353 = vld [vmem:[%s305 + $0x58] sm:$0xf]
      %v354 = vld [vmem:[%s305 + $0x5c] sm:$0xf]
      %v355 = vld [vmem:[%s305 + $0x60] sm:$0x1]
      %v356 = vld [vmem:[%s305 + $0x64] sm:$0xf]
      %v357 = vld [vmem:[%s305 + $0x68] sm:$0xf]
      %v358 = vld [vmem:[%s305 + $0x6c] sm:$0xf]
      %v359 = vld [vmem:[%s305 + $0x70] sm:$0xf]
      %v360 = vld [vmem:[%s305 + $0x74] sm:$0x1]
      %v361 = vld [vmem:[%s305 + $0x78] sm:$0xf]
      %v362 = vld [vmem:[%s305 + $0x7c] sm:$0xf]
      %v363 = vld [vmem:[%s305 + $0x80] sm:$0xf]
      %v364 = vld [vmem:[%s305 + $0x84] sm:$0xf]
      %v365 = vld [vmem:[%s305 + $0x88] sm:$0x1]
      %v366 = vld [vmem:[%s305 + $0x8c] sm:$0xf]
      %v367 = vld [vmem:[%s305 + $0x90] sm:$0xf]
      %v368 = vld [vmem:[%s305 + $0x94] sm:$0xf]
      %v369 = vld [vmem:[%s305 + $0x98] sm:$0xf]
      %v370 = vld [vmem:[%s305 + $0x9c] sm:$0x1]
      %v403 = vunpack.c.l.b16 %v331
      %v404 = vunpack.c.l.b16 %v332
      %v405 = vunpack.c.l.b16 %v333
      %v406 = vunpack.c.l.b16 %v334
      %v407 = vunpack.c.l.b16 %v336
      %v408 = vunpack.c.l.b16 %v337
      %v409 = vunpack.c.l.b16 %v338
      %v410 = vunpack.c.l.b16 %v339
      %v411 = vunpack.c.l.b16 %v341
      %v412 = vunpack.c.l.b16 %v342
      %v413 = vunpack.c.l.b16 %v343
      %v414 = vunpack.c.l.b16 %v344
      %v415 = vunpack.c.l.b16 %v346
      %v416 = vunpack.c.l.b16 %v347
      %v417 = vunpack.c.l.b16 %v348
      %v418 = vunpack.c.l.b16 %v349
      %v419 = vunpack.c.l.b16 %v351
      %v420 = vunpack.c.l.b16 %v352
      %v421 = vunpack.c.l.b16 %v353
      %v422 = vunpack.c.l.b16 %v354
      %v423 = vunpack.c.l.b16 %v356
      %v424 = vunpack.c.l.b16 %v357
      %v425 = vunpack.c.l.b16 %v358
      %v426 = vunpack.c.l.b16 %v359
      %v427 = vunpack.c.l.b16 %v361
      %v428 = vunpack.c.l.b16 %v362
      %v429 = vunpack.c.l.b16 %v363
      %v430 = vunpack.c.l.b16 %v364
      %v431 = vunpack.c.l.b16 %v366
      %v432 = vunpack.c.l.b16 %v367
      %v433 = vunpack.c.l.b16 %v368
      %v434 = vunpack.c.l.b16 %v369
      %v435 = vpack.c.b16 %v404, %v403
      %v436 = vpack.c.b16 %v406, %v405
      %v437 = vpack.c.b16 %v408, %v407
      %v438 = vpack.c.b16 %v410, %v409
      %v439 = vpack.c.b16 %v412, %v411
      %v440 = vpack.c.b16 %v414, %v413
      %v441 = vpack.c.b16 %v416, %v415
      %v442 = vpack.c.b16 %v418, %v417
      %v443 = vpack.c.b16 %v420, %v419
      %v444 = vpack.c.b16 %v422, %v421
      %v445 = vpack.c.b16 %v424, %v423
      %v446 = vpack.c.b16 %v426, %v425
      %v447 = vpack.c.b16 %v428, %v427
      %v448 = vpack.c.b16 %v430, %v429
      %v449 = vpack.c.b16 %v432, %v431
      %v450 = vpack.c.b16 %v434, %v433
      %v459 = vunpack.c.l.b16 %v335
      %v460 = vunpack.c.l.b16 %v340
      %v461 = vunpack.c.l.b16 %v345
      %v462 = vunpack.c.l.b16 %v350
      %v463 = vunpack.c.l.b16 %v355
      %v464 = vunpack.c.l.b16 %v360
      %v465 = vunpack.c.l.b16 %v365
      %v466 = vunpack.c.l.b16 %v370
      %v467 = vpack.c.b16 %v459, %v459
      %v468 = vpack.c.b16 %v460, %v460
      %v469 = vpack.c.b16 %v461, %v461
      %v470 = vpack.c.b16 %v462, %v462
      %v471 = vpack.c.b16 %v463, %v463
      %v472 = vpack.c.b16 %v464, %v464
      %v473 = vpack.c.b16 %v465, %v465
      %v474 = vpack.c.b16 %v466, %v466
      %vm475 = vsmask.f32 7424
      %v477 = vshrl.u32 %v435, 16
      %v479 = vshll.u32 %v435, 16
      %v481 = vrot.slane %v479, 1
      %v482 = vor.u32 %v477, %v481
      %v484 = vshll.u32 %v436, 16
      %v486 = vrot.slane %v484, 1
      %v487 = vsel %vm475, %v482, %v486
      %v488 = vshrl.u32 %v436, 16
      %v490 = vor.u32 %v488, %v486
      %v492 = vshll.u32 %v467, 16
      %v494 = vrot.slane %v492, 1
      %v495 = vsel %vm475, %v490, %v494
      %v497 = vshrl.u32 %v437, 16
      %v499 = vshll.u32 %v437, 16
      %v501 = vrot.slane %v499, 1
      %v502 = vor.u32 %v497, %v501
      %v504 = vshll.u32 %v438, 16
      %v506 = vrot.slane %v504, 1
      %v507 = vsel %vm475, %v502, %v506
      %v508 = vshrl.u32 %v438, 16
      %v510 = vor.u32 %v508, %v506
      %v512 = vshll.u32 %v468, 16
      %v514 = vrot.slane %v512, 1
      %v515 = vsel %vm475, %v510, %v514
      %v517 = vshrl.u32 %v439, 16
      %v519 = vshll.u32 %v439, 16
      %v521 = vrot.slane %v519, 1
      %v522 = vor.u32 %v517, %v521
      %v524 = vshll.u32 %v440, 16
      %v526 = vrot.slane %v524, 1
      %v527 = vsel %vm475, %v522, %v526
      %v528 = vshrl.u32 %v440, 16
      %v530 = vor.u32 %v528, %v526
      %v532 = vshll.u32 %v469, 16
      %v534 = vrot.slane %v532, 1
      %v535 = vsel %vm475, %v530, %v534
      %v537 = vshrl.u32 %v441, 16
      %v539 = vshll.u32 %v441, 16
      %v541 = vrot.slane %v539, 1
      %v542 = vor.u32 %v537, %v541
      %v544 = vshll.u32 %v442, 16
      %v546 = vrot.slane %v544, 1
      %v547 = vsel %vm475, %v542, %v546
      %v548 = vshrl.u32 %v442, 16
      %v550 = vor.u32 %v548, %v546
      %v552 = vshll.u32 %v470, 16
      %v554 = vrot.slane %v552, 1
      %v555 = vsel %vm475, %v550, %v554
      %v557 = vshrl.u32 %v443, 16
      %v559 = vshll.u32 %v443, 16
      %v561 = vrot.slane %v559, 1
      %v562 = vor.u32 %v557, %v561
      %v564 = vshll.u32 %v444, 16
      %v566 = vrot.slane %v564, 1
      %v567 = vsel %vm475, %v562, %v566
      %v568 = vshrl.u32 %v444, 16
      %v570 = vor.u32 %v568, %v566
      %v572 = vshll.u32 %v471, 16
      %v574 = vrot.slane %v572, 1
      %v575 = vsel %vm475, %v570, %v574
      %v577 = vshrl.u32 %v445, 16
      %v579 = vshll.u32 %v445, 16
      %v581 = vrot.slane %v579, 1
      %v582 = vor.u32 %v577, %v581
      %v584 = vshll.u32 %v446, 16
      %v586 = vrot.slane %v584, 1
      %v587 = vsel %vm475, %v582, %v586
      %v588 = vshrl.u32 %v446, 16
      %v590 = vor.u32 %v588, %v586
      %v592 = vshll.u32 %v472, 16
      %v594 = vrot.slane %v592, 1
      %v595 = vsel %vm475, %v590, %v594
      %v597 = vshrl.u32 %v447, 16
      %v599 = vshll.u32 %v447, 16
      %v601 = vrot.slane %v599, 1
      %v602 = vor.u32 %v597, %v601
      %v604 = vshll.u32 %v448, 16
      %v606 = vrot.slane %v604, 1
      %v607 = vsel %vm475, %v602, %v606
      %v608 = vshrl.u32 %v448, 16
      %v610 = vor.u32 %v608, %v606
      %v612 = vshll.u32 %v473, 16
      %v614 = vrot.slane %v612, 1
      %v615 = vsel %vm475, %v610, %v614
      %v617 = vshrl.u32 %v449, 16
      %v619 = vshll.u32 %v449, 16
      %v621 = vrot.slane %v619, 1
      %v622 = vor.u32 %v617, %v621
      %v624 = vshll.u32 %v450, 16
      %v626 = vrot.slane %v624, 1
      %v627 = vsel %vm475, %v622, %v626
      %v628 = vshrl.u32 %v450, 16
      %v630 = vor.u32 %v628, %v626
      %v632 = vshll.u32 %v474, 16
      %v634 = vrot.slane %v632, 1
      %v635 = vsel %vm475, %v630, %v634
      %636 = vrot.lane.b32.xlu0 %v487, 32
      %v637 = vpop.permute.xlu0 %636
      %638 = vrot.lane.b32.xlu0 %v495, 32
      %v639 = vpop.permute.xlu0 %638
      %640 = vrot.lane.b32.xlu0 %v507, 32
      %v641 = vpop.permute.xlu0 %640
      %642 = vrot.lane.b32.xlu0 %v515, 32
      %v643 = vpop.permute.xlu0 %642
      %644 = vrot.lane.b32.xlu0 %v527, 32
      %v645 = vpop.permute.xlu0 %644
      %646 = vrot.lane.b32.xlu0 %v535, 32
      %v647 = vpop.permute.xlu0 %646
      %648 = vrot.lane.b32.xlu0 %v547, 32
      %v649 = vpop.permute.xlu0 %648
      %650 = vrot.lane.b32.xlu0 %v555, 32
      %v651 = vpop.permute.xlu0 %650
      %652 = vrot.lane.b32.xlu0 %v567, 32
      %v653 = vpop.permute.xlu0 %652
      %654 = vrot.lane.b32.xlu0 %v575, 32
      %v655 = vpop.permute.xlu0 %654
      %656 = vrot.lane.b32.xlu0 %v587, 32
      %v657 = vpop.permute.xlu0 %656
      %658 = vrot.lane.b32.xlu0 %v595, 32
      %v659 = vpop.permute.xlu0 %658
      %660 = vrot.lane.b32.xlu0 %v607, 32
      %v661 = vpop.permute.xlu0 %660
      %662 = vrot.lane.b32.xlu0 %v615, 32
      %v663 = vpop.permute.xlu0 %662
      %664 = vrot.lane.b32.xlu0 %v627, 32
      %v665 = vpop.permute.xlu0 %664
      %666 = vrot.lane.b32.xlu0 %v635, 32
      %v667 = vpop.permute.xlu0 %666
      %vm668 = vcmask 1046528
      %v669 = vrot.slane %v435, 1
      %v670 = vrot.slane %v436, 1
      %v671 = vsel %vm668, %v669, %v670
      %v672 = vrot.slane %v467, 1
      %v673 = vsel %vm668, %v670, %v672
      %v674 = vrot.slane %v437, 1
      %v675 = vrot.slane %v438, 1
      %v676 = vsel %vm668, %v674, %v675
      %v677 = vrot.slane %v468, 1
      %v678 = vsel %vm668, %v675, %v677
      %v679 = vrot.slane %v439, 1
      %v680 = vrot.slane %v440, 1
      %v681 = vsel %vm668, %v679, %v680
      %v682 = vrot.slane %v469, 1
      %v683 = vsel %vm668, %v680, %v682
      %v684 = vrot.slane %v441, 1
      %v685 = vrot.slane %v442, 1
      %v686 = vsel %vm668, %v684, %v685
      %v687 = vrot.slane %v470, 1
      %v688 = vsel %vm668, %v685, %v687
      %v689 = vrot.slane %v443, 1
      %v690 = vrot.slane %v444, 1
      %v691 = vsel %vm668, %v689, %v690
      %v692 = vrot.slane %v471, 1
      %v693 = vsel %vm668, %v690, %v692
      %v694 = vrot.slane %v445, 1
      %v695 = vrot.slane %v446, 1
      %v696 = vsel %vm668, %v694, %v695
      %v697 = vrot.slane %v472, 1
      %v698 = vsel %vm668, %v695, %v697
      %v699 = vrot.slane %v447, 1
      %v700 = vrot.slane %v448, 1
      %v701 = vsel %vm668, %v699, %v700
      %v702 = vrot.slane %v473, 1
      %v703 = vsel %vm668, %v700, %v702
      %v704 = vrot.slane %v449, 1
      %v705 = vrot.slane %v450, 1
      %v706 = vsel %vm668, %v704, %v705
      %v707 = vrot.slane %v474, 1
      %v708 = vsel %vm668, %v705, %v707
      %709 = vrot.lane.b32.xlu0 %v671, 64
      %v710 = vpop.permute.xlu0 %709
      %711 = vrot.lane.b32.xlu0 %v673, 64
      %v712 = vpop.permute.xlu0 %711
      %713 = vrot.lane.b32.xlu0 %v676, 64
      %v714 = vpop.permute.xlu0 %713
      %715 = vrot.lane.b32.xlu0 %v678, 64
      %v716 = vpop.permute.xlu0 %715
      %717 = vrot.lane.b32.xlu0 %v681, 64
      %v718 = vpop.permute.xlu0 %717
      %719 = vrot.lane.b32.xlu0 %v683, 64
      %v720 = vpop.permute.xlu0 %719
      %721 = vrot.lane.b32.xlu0 %v686, 64
      %v722 = vpop.permute.xlu0 %721
      %723 = vrot.lane.b32.xlu0 %v688, 64
      %v724 = vpop.permute.xlu0 %723
      %725 = vrot.lane.b32.xlu0 %v691, 64
      %v726 = vpop.permute.xlu0 %725
      %727 = vrot.lane.b32.xlu0 %v693, 64
      %v728 = vpop.permute.xlu0 %727
      %729 = vrot.lane.b32.xlu0 %v696, 64
      %v730 = vpop.permute.xlu0 %729
      %731 = vrot.lane.b32.xlu0 %v698, 64
      %v732 = vpop.permute.xlu0 %731
      %733 = vrot.lane.b32.xlu0 %v701, 64
      %v734 = vpop.permute.xlu0 %733
      %735 = vrot.lane.b32.xlu0 %v703, 64
      %v736 = vpop.permute.xlu0 %735
      %737 = vrot.lane.b32.xlu0 %v706, 64
      %v738 = vpop.permute.xlu0 %737
      %739 = vrot.lane.b32.xlu0 %v708, 64
      %v740 = vpop.permute.xlu0 %739
      %vm741 = vcmask 261120
      %v743 = vsel %vm741, %v435, %v637
      %v745 = vsel %vm741, %v436, %v639
      %v747 = vsel %vm741, %v437, %v641
      %v749 = vsel %vm741, %v438, %v643
      %v751 = vsel %vm741, %v439, %v645
      %v753 = vsel %vm741, %v440, %v647
      %v755 = vsel %vm741, %v441, %v649
      %v757 = vsel %vm741, %v442, %v651
      %v759 = vsel %vm741, %v443, %v653
      %v761 = vsel %vm741, %v444, %v655
      %v763 = vsel %vm741, %v445, %v657
      %v765 = vsel %vm741, %v446, %v659
      %v767 = vsel %vm741, %v447, %v661
      %v769 = vsel %vm741, %v448, %v663
      %v771 = vsel %vm741, %v449, %v665
      %v773 = vsel %vm741, %v450, %v667
      %vm774 = vcmask 523264
      %v776 = vsel %vm774, %v743, %v710
      %v778 = vsel %vm774, %v745, %v712
      %v780 = vsel %vm774, %v747, %v714
      %v782 = vsel %vm774, %v749, %v716
      %v784 = vsel %vm774, %v751, %v718
      %v786 = vsel %vm774, %v753, %v720
      %v788 = vsel %vm774, %v755, %v722
      %v790 = vsel %vm774, %v757, %v724
      %v792 = vsel %vm774, %v759, %v726
      %v794 = vsel %vm774, %v761, %v728
      %v796 = vsel %vm774, %v763, %v730
      %v798 = vsel %vm774, %v765, %v732
      %v800 = vsel %vm774, %v767, %v734
      %v802 = vsel %vm774, %v769, %v736
      %v804 = vsel %vm774, %v771, %v738
      %v806 = vsel %vm774, %v773, %v740
      %v807 = vld [vmem:[%s311] sm:$0xf]
      %v808 = vld [vmem:[%s311 + $0x4] sm:$0xf]
      %v809 = vld [vmem:[%s311 + $0x8] sm:$0xf]
      %v810 = vld [vmem:[%s311 + $0xc] sm:$0xf]
      %v811 = vld [vmem:[%s311 + $0x10] sm:$0xf]
      %v812 = vld [vmem:[%s311 + $0x14] sm:$0xf]
      %v813 = vld [vmem:[%s311 + $0x18] sm:$0xf]
      %v814 = vld [vmem:[%s311 + $0x1c] sm:$0xf]
      %v815 = vld [vmem:[%s311 + $0x20] sm:$0xf]
      %v816 = vld [vmem:[%s311 + $0x24] sm:$0xf]
      %v817 = vld [vmem:[%s311 + $0x28] sm:$0xf]
      %v818 = vld [vmem:[%s311 + $0x2c] sm:$0xf]
      %v819 = vld [vmem:[%s314] sm:$0x1]
      %v821 = vperm.slane %v819, 0
      %v835 = vunpack.c.l.b16 %v807
      %v836 = vunpack.c.l.b16 %v808
      %v837 = vunpack.c.l.b16 %v809
      %v838 = vunpack.c.l.b16 %v810
      %v839 = vunpack.c.l.b16 %v811
      %v840 = vunpack.c.l.b16 %v812
      %v841 = vunpack.c.l.b16 %v813
      %v842 = vunpack.c.l.b16 %v814
      %v843 = vunpack.c.l.b16 %v815
      %v844 = vunpack.c.l.b16 %v816
      %v845 = vunpack.c.l.b16 %v817
      %v846 = vunpack.c.l.b16 %v818
      %v847 = vpack.c.b16 %v836, %v835
      %v848 = vpack.c.b16 %v838, %v837
      %v849 = vpack.c.b16 %v840, %v839
      %v850 = vpack.c.b16 %v842, %v841
      %v851 = vpack.c.b16 %v844, %v843
      %v852 = vpack.c.b16 %v846, %v845
      %vm859 = vcmask 785408
      %v860 = vsel %vm859, %v776, 0
      %v862 = vsel %vm859, %v778, 0
      %v864 = vsel %vm859, %v780, 0
      %v866 = vsel %vm859, %v782, 0
      %v868 = vsel %vm859, %v784, 0
      %v870 = vsel %vm859, %v786, 0
      %v872 = vsel %vm859, %v788, 0
      %v874 = vsel %vm859, %v790, 0
      %v876 = vsel %vm859, %v792, 0
      %v878 = vsel %vm859, %v794, 0
      %v880 = vsel %vm859, %v796, 0
      %v882 = vsel %vm859, %v798, 0
      %v884 = vsel %vm859, %v800, 0
      %v886 = vsel %vm859, %v802, 0
      %v888 = vsel %vm859, %v804, 0
      %v890 = vsel %vm859, %v806, 0
      %892 = vmatpush.bf16.msra.mxu0 0
      %893 = vmatpush.bf16.msra.mxu0 0
      %894 = vmatpush.bf16.msra.mxu0 %v852
      %895 = vmatpush.bf16.msra.mxu0 %v851
      %896 = vmatpush.bf16.msra.mxu0 %v850
      %897 = vmatpush.bf16.msra.mxu0 %v849
      %898 = vmatpush.bf16.msra.mxu0 %v848
      %899 = vmatpush.bf16.msra.mxu0 %v847
      %900 = vmatmul.bf16.gmra.mxu0 %v860
      %v901 = vpop.f32.mrf.mxu0
      %v902 = vadd.f32 %v821, %v901
      %v903 = vpop.f32.mrf.mxu0
      %v904 = vadd.f32 %v821, %v903
      %905 = vmatmul.bf16.gmra.mxu0 %v862
      %v906 = vpop.f32.mrf.mxu0
      %v907 = vadd.f32 %v821, %v906
      %v908 = vpop.f32.mrf.mxu0
      %v909 = vadd.f32 %v821, %v908
      %910 = vmatmul.bf16.gmra.mxu0 %v864
      %v911 = vpop.f32.mrf.mxu0
      %v912 = vadd.f32 %v821, %v911
      %v913 = vpop.f32.mrf.mxu0
      %v914 = vadd.f32 %v821, %v913
      %915 = vmatmul.bf16.gmra.mxu0 %v866
      %v916 = vpop.f32.mrf.mxu0
      %v917 = vadd.f32 %v821, %v916
      %v918 = vpop.f32.mrf.mxu0
      %v919 = vadd.f32 %v821, %v918
      %920 = vmatmul.bf16.gmra.mxu0 %v868
      %v921 = vpop.f32.mrf.mxu0
      %v922 = vadd.f32 %v821, %v921
      %v923 = vpop.f32.mrf.mxu0
      %v924 = vadd.f32 %v821, %v923
      %925 = vmatmul.bf16.gmra.mxu0 %v870
      %v926 = vpop.f32.mrf.mxu0
      %v927 = vadd.f32 %v821, %v926
      %v928 = vpop.f32.mrf.mxu0
      %v929 = vadd.f32 %v821, %v928
      %930 = vmatmul.bf16.gmra.mxu0 %v872
      %v931 = vpop.f32.mrf.mxu0
      %v932 = vadd.f32 %v821, %v931
      %v933 = vpop.f32.mrf.mxu0
      %v934 = vadd.f32 %v821, %v933
      %935 = vmatmul.bf16.gmra.mxu0 %v874
      %v936 = vpop.f32.mrf.mxu0
      %v937 = vadd.f32 %v821, %v936
      %v938 = vpop.f32.mrf.mxu0
      %v939 = vadd.f32 %v821, %v938
      %940 = vmatmul.bf16.gmra.mxu0 %v876
      %v941 = vpop.f32.mrf.mxu0
      %v942 = vadd.f32 %v821, %v941
      %v943 = vpop.f32.mrf.mxu0
      %v944 = vadd.f32 %v821, %v943
      %945 = vmatmul.bf16.gmra.mxu0 %v878
      %v946 = vpop.f32.mrf.mxu0
      %v947 = vadd.f32 %v821, %v946
      %v948 = vpop.f32.mrf.mxu0
      %v949 = vadd.f32 %v821, %v948
      %950 = vmatmul.bf16.gmra.mxu0 %v880
      %v951 = vpop.f32.mrf.mxu0
      %v952 = vadd.f32 %v821, %v951
      %v953 = vpop.f32.mrf.mxu0
      %v954 = vadd.f32 %v821, %v953
      %955 = vmatmul.bf16.gmra.mxu0 %v882
      %v956 = vpop.f32.mrf.mxu0
      %v957 = vadd.f32 %v821, %v956
      %v958 = vpop.f32.mrf.mxu0
      %v959 = vadd.f32 %v821, %v958
      %960 = vmatmul.bf16.gmra.mxu0 %v884
      %v961 = vpop.f32.mrf.mxu0
      %v962 = vadd.f32 %v821, %v961
      %v963 = vpop.f32.mrf.mxu0
      %v964 = vadd.f32 %v821, %v963
      %965 = vmatmul.bf16.gmra.mxu0 %v886
      %v966 = vpop.f32.mrf.mxu0
      %v967 = vadd.f32 %v821, %v966
      %v968 = vpop.f32.mrf.mxu0
      %v969 = vadd.f32 %v821, %v968
      %970 = vmatmul.bf16.gmra.mxu0 %v888
      %v971 = vpop.f32.mrf.mxu0
      %v972 = vadd.f32 %v821, %v971
      %v973 = vpop.f32.mrf.mxu0
      %v974 = vadd.f32 %v821, %v973
      %975 = vmatmul.bf16.gmra.mxu0 %v890
      %v976 = vpop.f32.mrf.mxu0
      %v977 = vadd.f32 %v821, %v976
      %v978 = vpop.f32.mrf.mxu0
      %v979 = vadd.f32 %v821, %v978
      %980 = vdwg.mxu0
      %v981 = vmax.f32 %v902, 0.0
      %v982 = vmax.f32 %v904, 0.0
      %v983 = vmax.f32 %v907, 0.0
      %v984 = vmax.f32 %v909, 0.0
      %v985 = vmax.f32 %v912, 0.0
      %v986 = vmax.f32 %v914, 0.0
      %v987 = vmax.f32 %v917, 0.0
      %v988 = vmax.f32 %v919, 0.0
      %v989 = vmax.f32 %v922, 0.0
      %v990 = vmax.f32 %v924, 0.0
      %v991 = vmax.f32 %v927, 0.0
      %v992 = vmax.f32 %v929, 0.0
      %v993 = vmax.f32 %v932, 0.0
      %v994 = vmax.f32 %v934, 0.0
      %v995 = vmax.f32 %v937, 0.0
      %v996 = vmax.f32 %v939, 0.0
      %v997 = vmax.f32 %v942, 0.0
      %v998 = vmax.f32 %v944, 0.0
      %v999 = vmax.f32 %v947, 0.0
      %v1000 = vmax.f32 %v949, 0.0
      %v1001 = vmax.f32 %v952, 0.0
      %v1002 = vmax.f32 %v954, 0.0
      %v1003 = vmax.f32 %v957, 0.0
      %v1004 = vmax.f32 %v959, 0.0
      %v1005 = vmax.f32 %v962, 0.0
      %v1006 = vmax.f32 %v964, 0.0
      %v1007 = vmax.f32 %v967, 0.0
      %v1008 = vmax.f32 %v969, 0.0
      %v1009 = vmax.f32 %v972, 0.0
      %v1010 = vmax.f32 %v974, 0.0
      %v1011 = vmax.f32 %v977, 0.0
      %v1012 = vmax.f32 %v979, 0.0
      %v1013 = vlaneseq
      %v1014 = vshrl.u32 %v1013, 7
      %v1015 = vadd.s32 %v1014, 8
      %v1016 = vadd.s32 %v1014, 16
      %v1017 = vadd.s32 %v1014, 24
      %vm1018 = vcmp.lt.s32.totalorder %v1014, 30
      %vm1019 = vcmp.lt.s32.totalorder %v1015, 30
      %vm1020 = vcmp.lt.s32.totalorder %v1016, 30
      %vm1021 = vcmp.lt.s32.totalorder %v1017, 30
      %v1022 = vsel %vm1018, %v981, -inf
      %v1023 = vsel %vm1019, %v982, -inf
      %v1024 = vsel %vm1020, %v983, -inf
      %v1025 = vsel %vm1021, %v984, -inf
      %v1026 = vsel %vm1018, %v985, -inf
      %v1027 = vsel %vm1019, %v986, -inf
      %v1028 = vsel %vm1020, %v987, -inf
      %v1029 = vsel %vm1021, %v988, -inf
      %v1030 = vsel %vm1018, %v989, -inf
      %v1031 = vsel %vm1019, %v990, -inf
      %v1032 = vsel %vm1020, %v991, -inf
      %v1033 = vsel %vm1021, %v992, -inf
      %v1034 = vsel %vm1018, %v993, -inf
      %v1035 = vsel %vm1019, %v994, -inf
      %v1036 = vsel %vm1020, %v995, -inf
      %v1037 = vsel %vm1021, %v996, -inf
      %v1038 = vsel %vm1018, %v997, -inf
      %v1039 = vsel %vm1019, %v998, -inf
      %v1040 = vsel %vm1020, %v999, -inf
      %v1041 = vsel %vm1021, %v1000, -inf
      %v1042 = vsel %vm1018, %v1001, -inf
      %v1043 = vsel %vm1019, %v1002, -inf
      %v1044 = vsel %vm1020, %v1003, -inf
      %v1045 = vsel %vm1021, %v1004, -inf
      %v1046 = vsel %vm1018, %v1005, -inf
      %v1047 = vsel %vm1019, %v1006, -inf
      %v1048 = vsel %vm1020, %v1007, -inf
      %v1049 = vsel %vm1021, %v1008, -inf
      %v1050 = vsel %vm1018, %v1009, -inf
      %v1051 = vsel %vm1019, %v1010, -inf
      %v1052 = vsel %vm1020, %v1011, -inf
      %v1053 = vsel %vm1021, %v1012, -inf
      %v1054 = vmax.f32 %v1022, %v1023
      %v1055 = vmax.f32 %v1054, %v1024
      %v1056 = vmax.f32 %v1055, %v1025
      %v1057 = vrot.slane %v1056, 4
      %v1058 = vmax.f32 %v1056, %v1057
      %v1059 = vrot.slane %v1058, 2
      %v1060 = vmax.f32 %v1058, %v1059
      %v1061 = vrot.slane %v1060, 1
      %v1062 = vmax.f32 %v1060, %v1061
      %v1063 = vmax.f32 %v1026, %v1027
      %v1064 = vmax.f32 %v1063, %v1028
      %v1065 = vmax.f32 %v1064, %v1029
      %v1066 = vrot.slane %v1065, 4
      %v1067 = vmax.f32 %v1065, %v1066
      %v1068 = vrot.slane %v1067, 2
      %v1069 = vmax.f32 %v1067, %v1068
      %v1070 = vrot.slane %v1069, 1
      %v1071 = vmax.f32 %v1069, %v1070
      %v1072 = vmax.f32 %v1030, %v1031
      %v1073 = vmax.f32 %v1072, %v1032
      %v1074 = vmax.f32 %v1073, %v1033
      %v1075 = vrot.slane %v1074, 4
      %v1076 = vmax.f32 %v1074, %v1075
      %v1077 = vrot.slane %v1076, 2
      %v1078 = vmax.f32 %v1076, %v1077
      %v1079 = vrot.slane %v1078, 1
      %v1080 = vmax.f32 %v1078, %v1079
      %v1081 = vmax.f32 %v1034, %v1035
      %v1082 = vmax.f32 %v1081, %v1036
      %v1083 = vmax.f32 %v1082, %v1037
      %v1084 = vrot.slane %v1083, 4
      %v1085 = vmax.f32 %v1083, %v1084
      %v1086 = vrot.slane %v1085, 2
      %v1087 = vmax.f32 %v1085, %v1086
      %v1088 = vrot.slane %v1087, 1
      %v1089 = vmax.f32 %v1087, %v1088
      %v1090 = vmax.f32 %v1038, %v1039
      %v1091 = vmax.f32 %v1090, %v1040
      %v1092 = vmax.f32 %v1091, %v1041
      %v1093 = vrot.slane %v1092, 4
      %v1094 = vmax.f32 %v1092, %v1093
      %v1095 = vrot.slane %v1094, 2
      %v1096 = vmax.f32 %v1094, %v1095
      %v1097 = vrot.slane %v1096, 1
      %v1098 = vmax.f32 %v1096, %v1097
      %v1099 = vmax.f32 %v1042, %v1043
      %v1100 = vmax.f32 %v1099, %v1044
      %v1101 = vmax.f32 %v1100, %v1045
      %v1102 = vrot.slane %v1101, 4
      %v1103 = vmax.f32 %v1101, %v1102
      %v1104 = vrot.slane %v1103, 2
      %v1105 = vmax.f32 %v1103, %v1104
      %v1106 = vrot.slane %v1105, 1
      %v1107 = vmax.f32 %v1105, %v1106
      %v1108 = vmax.f32 %v1046, %v1047
      %v1109 = vmax.f32 %v1108, %v1048
      %v1110 = vmax.f32 %v1109, %v1049
      %v1111 = vrot.slane %v1110, 4
      %v1112 = vmax.f32 %v1110, %v1111
      %v1113 = vrot.slane %v1112, 2
      %v1114 = vmax.f32 %v1112, %v1113
      %v1115 = vrot.slane %v1114, 1
      %v1116 = vmax.f32 %v1114, %v1115
      %v1117 = vmax.f32 %v1050, %v1051
      %v1118 = vmax.f32 %v1117, %v1052
      %v1119 = vmax.f32 %v1118, %v1053
      %v1120 = vrot.slane %v1119, 4
      %v1121 = vmax.f32 %v1119, %v1120
      %v1122 = vrot.slane %v1121, 2
      %v1123 = vmax.f32 %v1121, %v1122
      %v1124 = vrot.slane %v1123, 1
      %v1125 = vmax.f32 %v1123, %v1124
      %v1126 = vpack.c.bf16 %v1062, %v1062
      %v1127 = vpack.c.bf16 %v1071, %v1071
      %v1128 = vpack.c.bf16 %v1080, %v1080
      %v1129 = vpack.c.bf16 %v1089, %v1089
      %v1130 = vpack.c.bf16 %v1098, %v1098
      %v1131 = vpack.c.bf16 %v1107, %v1107
      %v1132 = vpack.c.bf16 %v1116, %v1116
      %v1133 = vpack.c.bf16 %v1125, %v1125
      %v1134 = vld [vmem:[%s319] sm:$0xf]
      %v1135 = vld [vmem:[%s319 + $0x4] sm:$0xf]
      %v1136 = vld [vmem:[%s319 + $0x8] sm:$0xf]
      %v1137 = vld [vmem:[%s319 + $0xc] sm:$0xf]
      %v1138 = vld [vmem:[%s319 + $0x10] sm:$0xf]
      %v1139 = vld [vmem:[%s319 + $0x14] sm:$0xf]
      %v1140 = vld [vmem:[%s319 + $0x18] sm:$0xf]
      %v1141 = vld [vmem:[%s319 + $0x1c] sm:$0xf]
      %v1142 = vld [vmem:[%s319 + $0x20] sm:$0xf]
      %v1143 = vld [vmem:[%s319 + $0x24] sm:$0xf]
      %v1144 = vld [vmem:[%s319 + $0x28] sm:$0xf]
      %v1145 = vld [vmem:[%s319 + $0x2c] sm:$0xf]
      %v1146 = vld [vmem:[%s319 + $0x30] sm:$0xf]
      %v1147 = vld [vmem:[%s319 + $0x34] sm:$0xf]
      %v1148 = vld [vmem:[%s319 + $0x38] sm:$0xf]
      %v1149 = vld [vmem:[%s319 + $0x3c] sm:$0xf]
      %v1150 = vld [vmem:[%s322] sm:$0x1]
      %v1152 = vperm.slane %v1150, 0
      %v1162 = vunpack.c.l.b16 %v1126
      %v1163 = vunpack.c.l.b16 %v1127
      %v1164 = vunpack.c.l.b16 %v1128
      %v1165 = vunpack.c.l.b16 %v1129
      %v1166 = vunpack.c.l.b16 %v1130
      %v1167 = vunpack.c.l.b16 %v1131
      %v1168 = vunpack.c.l.b16 %v1132
      %v1169 = vunpack.c.l.b16 %v1133
      %vm1170 = vcmask 1041409
      %v1171 = vsel %vm1170, %v1163, %v1162
      %vm1172 = vcmask 1042434
      %v1173 = vsel %vm1172, %v1164, %v1171
      %vm1174 = vcmask 1043459
      %v1175 = vsel %vm1174, %v1165, %v1173
      %vm1176 = vcmask 1044484
      %v1177 = vsel %vm1176, %v1166, %v1175
      %vm1178 = vcmask 1045509
      %v1179 = vsel %vm1178, %v1167, %v1177
      %vm1180 = vcmask 1046534
      %v1181 = vsel %vm1180, %v1168, %v1179
      %vm1182 = vcmask 1047559
      %v1183 = vsel %vm1182, %v1169, %v1181
      %v1184 = vpack.c.b16 %v1183, %v1183
      %v1202 = vunpack.c.l.b16 %v1134
      %v1203 = vunpack.c.l.b16 %v1135
      %v1204 = vunpack.c.l.b16 %v1136
      %v1205 = vunpack.c.l.b16 %v1137
      %v1206 = vunpack.c.l.b16 %v1138
      %v1207 = vunpack.c.l.b16 %v1139
      %v1208 = vunpack.c.l.b16 %v1140
      %v1209 = vunpack.c.l.b16 %v1141
      %v1210 = vunpack.c.l.b16 %v1142
      %v1211 = vunpack.c.l.b16 %v1143
      %v1212 = vunpack.c.l.b16 %v1144
      %v1213 = vunpack.c.l.b16 %v1145
      %v1214 = vunpack.c.l.b16 %v1146
      %v1215 = vunpack.c.l.b16 %v1147
      %v1216 = vunpack.c.l.b16 %v1148
      %v1217 = vunpack.c.l.b16 %v1149
      %v1218 = vpack.c.b16 %v1203, %v1202
      %v1219 = vpack.c.b16 %v1205, %v1204
      %v1220 = vpack.c.b16 %v1207, %v1206
      %v1221 = vpack.c.b16 %v1209, %v1208
      %v1222 = vpack.c.b16 %v1211, %v1210
      %v1223 = vpack.c.b16 %v1213, %v1212
      %v1224 = vpack.c.b16 %v1215, %v1214
      %v1225 = vpack.c.b16 %v1217, %v1216
      %1234 = vmatpush.bf16.msra.mxu0 %v1225
      %1235 = vmatpush.bf16.msra.mxu0 %v1224
      %1236 = vmatpush.bf16.msra.mxu0 %v1223
      %1237 = vmatpush.bf16.msra.mxu0 %v1222
      %1238 = vmatpush.bf16.msra.mxu0 %v1221
      %1239 = vmatpush.bf16.msra.mxu0 %v1220
      %1240 = vmatpush.bf16.msra.mxu0 %v1219
      %1241 = vmatpush.bf16.msra.mxu0 %v1218
      %1242 = vmatmul.bf16.gmra.mxu0 %v1184
      %v1243 = vpop.f32.mrf.mxu0
      %v1244 = vadd.f32 %v1152, %v1243
      %v1245 = vpop.f32.mrf.mxu0
      %1246 = vdwg.mxu0
      %1247 = vst [vmem:[%s329] sm:$0xff] %v1244
      %p1248 = scmp.lt.s32.totalorder %s20, 1
      %s1249 = scalar_select %p1248, %s20, 1
      %p1250 = scmp.lt.s32.totalorder %s21, 0
      %s1251 = scalar_select %p1250, %s21, 0
      %s1252 = sadd.s32 %s1251, %s1249
      %s1253 = smul.addr %s1252, 8
      %s1254 = scalar_lea.vmem %s5, %s1253
      // Predicated region
      $region41: #{deepconn_forward.1} parent=39 // pred_check
        %p1255 = pneg %p180
      $region42: #{deepconn_forward.1} parent=39 // pred_check_branch
        %1257 = sbr.rel (%p1255) target = $region44
      $region43: #{deepconn_forward.1} parent=39 // pred_region
        _
      $region44: #{deepconn_forward.1} parent=39 // pred_fallthru
        _
    $region40: #{deepconn_forward.1} parent=5 // pred_fallthru
      _
    %p1258 = scmp.le.s32.totalorder 2, %s11
    // Predicated region
    $region45: #{deepconn_forward.1} parent=5 // pred_check
      %p1259 = pneg %p1258
    $region46: #{deepconn_forward.1} parent=5 // pred_check_branch
      %1261 = sbr.rel (%p1259) target = $region48
    $region47: #{deepconn_forward.1} parent=5 // pred_region
      %s1262 = ssub.s32 %s11, 2
      // Predicated region
      $region49: #{deepconn_forward.1} parent=47 // pred_check
        %p1263 = pneg %p186
      $region50: #{deepconn_forward.1} parent=47 // pred_check_branch
        %1265 = sbr.rel (%p1263) target = $region52
      $region51: #{deepconn_forward.1} parent=47 // pred_region
        %p1266 = scmp.lt.s32.totalorder %s22, 1
        %s1267 = scalar_select %p1266, %s22, 1
        %p1268 = scmp.lt.s32.totalorder %s23, 0
        %s1269 = scalar_select %p1268, %s23, 0
        %s1270 = sadd.s32 %s1269, %s1267
        %s1271 = smul.addr %s1270, 8
        %s1272 = scalar_lea.vmem %s5, %s1271
      $region52: #{deepconn_forward.1} parent=47 // pred_fallthru
        _
    $region48: #{deepconn_forward.1} parent=5 // pred_fallthru
      _
  $region6: #{deepconn_forward.1} parent=0 // loop_footer
    %s15 = sadd.s32 1, %s11
  $region7: #{deepconn_forward.1} parent=0 // loop_footer_branch
    %10 = sbr.rel target = $region3
  $region8: #{deepconn_forward.1} parent=0 // loop_exit
    _

</llo_original>
